<compile_context>
chip_gen: v7x
topology: tpu7x:2x2x1
jax: 0.10.0
libtpu: 0.0.40
codegen_flags: <defaults>
</compile_context>

<pallas_src>
import functools

import jax
import jax.numpy as jnp
from jax import lax
from jax.experimental import pallas as pl
from jax.experimental.pallas import tpu as pltpu


def _dcl_kernel(x_ref, w3_ref, b3_ref, w1_ref, b1_ref, out_ref, xp_ref,
                *, d, W, GC, HWp, PAD):
    # x_ref  : (GC, HWp)           G packed images: channels on sublanes, pixels on lanes
    # w3_ref : (9, GC, GC)         per-tap block-diagonal (out, in) matrices, tap = ky*3+kx
    # b3_ref : (GC, 1)
    # w1_ref : (GC, GC)            block-diagonal 1x1 conv
    # b1_ref : (GC, 1)
    # out_ref: (GC, HWp)
    # xp_ref : (GC, PAD + HWp + PAD)  zero-padded slab (VMEM scratch)
    x = x_ref[...]                                    # single load; also the residual

    # Zero-padded slab along the flattened pixel axis; vertical out-of-range
    # taps land in the zero regions.  Re-zeroed every step (no program_id guard).
    xp_ref[:, 0:PAD] = jnp.zeros((GC, PAD), xp_ref.dtype)
    xp_ref[:, PAD + HWp:PAD + HWp + PAD] = jnp.zeros((GC, PAD), xp_ref.dtype)
    xp_ref[:, PAD:PAD + HWp] = x

    # Column-validity masks, built once at full shape and reused by all taps:
    # a +-d lane shift crosses row boundaries; those lanes must read as zero.
    col = lax.broadcasted_iota(jnp.int32, (GC, HWp), 1) % W
    mask_l = col >= d                  # tap reads column  w - d
    mask_r = col < (W - d)             # tap reads column  w + d

    # Register-resident f32 accumulator, initialized with the conv bias
    # (replaces the old VMEM acc scratch + separate "+ b3" pass).
    acc = jnp.broadcast_to(b3_ref[...], (GC, HWp)).astype(jnp.float32)
    for ky in range(3):
        for kx in range(3):
            s = (ky - 1) * d * W + (kx - 1) * d        # static flat pixel shift
            tap = xp_ref[:, PAD + s:PAD + s + HWp]     # == x[:, p + s], zero-padded
            if kx > 1:
                tap = jnp.where(mask_r, tap, 0.0)
            elif kx < 1:
                tap = jnp.where(mask_l, tap, 0.0)
            acc = acc + jnp.dot(w3_ref[ky * 3 + kx], tap,
                                preferred_element_type=jnp.float32)

    hidden = jnp.maximum(acc, 0.0)                                     # ReLU
    y = jnp.dot(w1_ref[...], hidden,
                preferred_element_type=jnp.float32) + b1_ref[...]      # 1x1 conv
    out_ref[...] = (x + y).astype(out_ref.dtype)                       # residual


def dcl_forward(x_nchw, w3, b3, w1, b1, *, dilation):
    """x_nchw: (N, C, H, W); w3: (C, C, 3, 3) OIHW; b3: (C,);
    w1: (C, C) = (out, in); b1: (C,).  Returns (N, C, H, W)."""
    N, C, H, W = x_nchw.shape
    d = dilation
    HW = H * W
    HWp = ((HW + 127) // 128) * 128            # lane-dense pixel axis (unmasked vst)
    PAD = ((d * W + d + 127) // 128) * 128     # covers max |flat shift|, lane aligned

    # Pack G images per grid step to fill the 8 f32 sublanes, but keep >= 2
    # grid steps when possible so both v7x TensorCores get work.
    G = max(1, 8 // C)
    while G > 1 and (N % G != 0 or N // G < 2):
        G -= 1
    GC = G * C

    x_flat = x_nchw.reshape(N, C, HW)
    if HWp != HW:
        x_flat = jnp.pad(x_flat, ((0, 0), (0, 0), (0, HWp - HW)))
    x_blk = x_flat.reshape(N // G, GC, HWp)

    # Block-diagonal weights so G packed images are convolved independently.
    eye_g = jnp.eye(G, dtype=w3.dtype)
    w3_taps = jnp.transpose(w3, (2, 3, 0, 1)).reshape(9, C, C)   # [tap, out, in]
    w3_big = jnp.stack([jnp.kron(eye_g, w3_taps[t]) for t in range(9)], axis=0)
    w1_big = jnp.kron(eye_g, w1)
    b3_big = jnp.tile(b3, G).reshape(GC, 1)
    b1_big = jnp.tile(b1, G).reshape(GC, 1)

    kernel = functools.partial(_dcl_kernel, d=d, W=W, GC=GC, HWp=HWp, PAD=PAD)

    out_blk = pl.pallas_call(
        kernel,
        out_shape=jax.ShapeDtypeStruct((N // G, GC, HWp), x_nchw.dtype),
        grid_spec=pltpu.PrefetchScalarGridSpec(
            num_scalar_prefetch=0,
            grid=(N // G,),
            in_specs=[
                pl.BlockSpec((None, GC, HWp), lambda n: (n, 0, 0)),   # x (squeezed)
                pl.BlockSpec((9, GC, GC), lambda n: (0, 0, 0)),       # w3 taps
                pl.BlockSpec((GC, 1), lambda n: (0, 0)),              # b3
                pl.BlockSpec((GC, GC), lambda n: (0, 0)),             # w1
                pl.BlockSpec((GC, 1), lambda n: (0, 0)),              # b1
            ],
            out_specs=pl.BlockSpec((None, GC, HWp), lambda n: (n, 0, 0)),
            scratch_shapes=[
                pltpu.VMEM((GC, HWp + 2 * PAD), x_nchw.dtype),        # padded slab
            ],
        ),
        compiler_params=pltpu.CompilerParams(
            dimension_semantics=("parallel",),
            vmem_limit_bytes=32 * 1024 * 1024,   # within v7x 64 MiB/TC budget
        ),
    )(x_blk, w3_big, b3_big, w1_big, b1_big)

    out = out_blk.reshape(N, C, HWp)
    if HWp != HW:
        out = out[:, :, :HW]
    return out.reshape(N, C, H, W)


def dcl_reference(x, w3, b3, w1, b1, *, dilation):
    d = dilation
    y = lax.conv_general_dilated(
        x, w3, window_strides=(1, 1), padding=[(d, d), (d, d)],
        rhs_dilation=(d, d), dimension_numbers=("NCHW", "OIHW", "NCHW"))
    y = y + b3[None, :, None, None]
    y = jnp.maximum(y, 0.0)
    y = jnp.einsum("oc,nchw->nohw", w1, y) + b1[None, :, None, None]
    return x + y


if __name__ == "__main__":
    # DCl(stride=2, in_ch=4): dilation=pad=2, C=4, on 16x16 images.
    C, H, W = 4, 16, 16
    dilation = 2

    key = jax.random.PRNGKey(0)
    k_w3, k_b3, k_w1, k_b1, k_x2, k_x4 = jax.random.split(key, 6)

    w3 = jax.random.normal(k_w3, (C, C, 3, 3), jnp.float32) * 0.1     # OIHW
    b3 = jax.random.normal(k_b3, (C,), jnp.float32) * 0.1
    w1 = jax.random.normal(k_w1, (C, C), jnp.float32) * 0.1           # (out, in)
    b1 = jax.random.normal(k_b1, (C,), jnp.float32) * 0.1

    # N=2 exercises the unpacked path (G=1, 2 parallel grid steps);
    # N=4 exercises the sublane-packed path (G=2, full 8-row slabs, 2 steps).
    for N, k_x in ((2, k_x2), (4, k_x4)):
        x = jax.random.normal(k_x, (N, C, H, W), jnp.float32)          # NCHW
        out = jax.block_until_ready(
            dcl_forward(x, w3, b3, w1, b1, dilation=dilation))
        ref = dcl_reference(x, w3, b3, w1, b1, dilation=dilation)
        assert out.shape == (N, C, H, W)
        err = float(jnp.max(jnp.abs(out - ref)))
        assert jnp.allclose(out, ref, atol=1e-4, rtol=1e-4), (
            "N=%d max abs err = %g" % (N, err))

    print("KERNEL_OK")
</pallas_src>

<mosaic_0001>
module attributes {stable_mosaic.version = 11 : i64} {
  func.func @_dcl_kernel(%arg0: i32, %arg1: memref<1x4x256xf32, #tpu.memory_space<vmem>>, %arg2: memref<9x4x4xf32, #tpu.memory_space<vmem>>, %arg3: memref<4x1xf32, #tpu.memory_space<vmem>>, %arg4: memref<4x4xf32, #tpu.memory_space<vmem>>, %arg5: memref<4x1xf32, #tpu.memory_space<vmem>>, %arg6: memref<1x4x256xf32, #tpu.memory_space<vmem>>, %arg7: memref<4x512xf32, #tpu.memory_space<vmem>>) attributes {dimension_semantics = [#tpu.dimension_semantics<parallel>], iteration_bounds = array<i64: 2>, scalar_prefetch = 0 : i64, scratch_operands = 1 : i64, tpu.core_type = #tpu.core_type<tc>, window_params = [{transform_indices = @transform_0, window_bounds = array<i64: 1, 4, 256>}, {pipeline_mode = #tpu.pipeline_mode<synchronous>, transform_indices = @transform_1, window_bounds = array<i64: 9, 4, 4>}, {pipeline_mode = #tpu.pipeline_mode<synchronous>, transform_indices = @transform_2, window_bounds = array<i64: 4, 1>}, {pipeline_mode = #tpu.pipeline_mode<synchronous>, transform_indices = @transform_3, window_bounds = array<i64: 4, 4>}, {pipeline_mode = #tpu.pipeline_mode<synchronous>, transform_indices = @transform_4, window_bounds = array<i64: 4, 1>}, {transform_indices = @transform_5, window_bounds = array<i64: 1, 4, 256>}]} {
    %c0 = arith.constant 0 : index
    %c0_0 = arith.constant 0 : index
    %c0_1 = arith.constant 0 : index
    %0 = vector.load %arg1[%c0, %c0_0, %c0_1] : memref<1x4x256xf32, #tpu.memory_space<vmem>>, vector<1x4x256xf32>
    %1 = vector.shape_cast %0 : vector<1x4x256xf32> to vector<4x256xf32>
    %cst = arith.constant 0.000000e+00 : f32
    %2 = vector.broadcast %cst : f32 to vector<4x128xf32>
    %c0_2 = arith.constant 0 : index
    %c0_3 = arith.constant 0 : index
    %3 = vector.load %arg7[%c0_2, %c0_3] : memref<4x512xf32, #tpu.memory_space<vmem>>, vector<4x128xf32>
    tpu.vector_store %arg7[%c0_2, %c0_3], %2 {strides = array<i32>} : memref<4x512xf32, #tpu.memory_space<vmem>>, vector<4x128xf32>,
    %cst_4 = arith.constant 0.000000e+00 : f32
    %4 = vector.broadcast %cst_4 : f32 to vector<4x128xf32>
    %c0_5 = arith.constant 0 : index
    %c384 = arith.constant 384 : index
    %5 = vector.load %arg7[%c0_5, %c384] : memref<4x512xf32, #tpu.memory_space<vmem>>, vector<4x128xf32>
    tpu.vector_store %arg7[%c0_5, %c384], %4 {strides = array<i32>} : memref<4x512xf32, #tpu.memory_space<vmem>>, vector<4x128xf32>,
    %c0_6 = arith.constant 0 : index
    %c128 = arith.constant 128 : index
    %6 = vector.load %arg7[%c0_6, %c128] : memref<4x512xf32, #tpu.memory_space<vmem>>, vector<4x256xf32>
    tpu.vector_store %arg7[%c0_6, %c128], %1 {strides = array<i32>} : memref<4x512xf32, #tpu.memory_space<vmem>>, vector<4x256xf32>,
    %7 = tpu.iota {dimensions = array<i32: 1>} : vector<4x256xi32>
    %c16_i32 = arith.constant 16 : i32
    %c0_i32 = arith.constant 0 : i32
    %8 = arith.cmpi eq, %c16_i32, %c0_i32 : i32
    %c1_i32 = arith.constant 1 : i32
    %9 = arith.select %8, %c1_i32, %c16_i32 : i32
    %10 = vector.broadcast %9 : i32 to vector<4x256xi32>
    %11 = arith.remsi %7, %10 : vector<4x256xi32>
    %c0_i32_7 = arith.constant 0 : i32
    %12 = vector.broadcast %c0_i32_7 : i32 to vector<4x256xi32>
    %13 = arith.cmpi ne, %11, %12 : vector<4x256xi32>
    %c0_i32_8 = arith.constant 0 : i32
    %14 = vector.broadcast %c0_i32_8 : i32 to vector<4x256xi32>
    %15 = arith.cmpi slt, %11, %14 : vector<4x256xi32>
    %c0_i32_9 = arith.constant 0 : i32
    %16 = arith.cmpi slt, %9, %c0_i32_9 : i32
    %17 = vector.broadcast %16 : i1 to vector<4x256xi1>
    %18 = vector.broadcast %17 : vector<4x256xi1> to vector<4x256xi1>
    %19 = arith.xori %15, %18 : vector<4x256xi1>
    %20 = arith.andi %19, %13 : vector<4x256xi1>
    %21 = vector.broadcast %9 : i32 to vector<4x256xi32>
    %22 = arith.addi %11, %21 : vector<4x256xi32>
    %23 = arith.select %20, %22, %11 : vector<4x256xi1>, vector<4x256xi32>
    %c2_i32 = arith.constant 2 : i32
    %24 = vector.broadcast %c2_i32 : i32 to vector<4x256xi32>
    %25 = arith.cmpi sge, %23, %24 : vector<4x256xi32>
    %c14_i32 = arith.constant 14 : i32
    %26 = vector.broadcast %c14_i32 : i32 to vector<4x256xi32>
    %27 = arith.cmpi slt, %23, %26 : vector<4x256xi32>
    %c0_10 = arith.constant 0 : index
    %c0_11 = arith.constant 0 : index
    %28 = vector.load %arg3[%c0_10, %c0_11] : memref<4x1xf32, #tpu.memory_space<vmem>>, vector<4x1xf32>
    %29 = vector.shape_cast %28 : vector<4x1xf32> to vector<4x1xf32>
    %30 = vector.broadcast %29 : vector<4x1xf32> to vector<4x256xf32>
    %c0_12 = arith.constant 0 : index
    %c94 = arith.constant 94 : index
    %31 = vector.load %arg7[%c0_12, %c94] : memref<4x512xf32, #tpu.memory_space<vmem>>, vector<4x256xf32>
    %cst_13 = arith.constant 0.000000e+00 : f32
    %32 = vector.broadcast %cst_13 : f32 to vector<4x256xf32>
    %33 = arith.select %25, %31, %32 : vector<4x256xi1>, vector<4x256xf32>
    %c0_14 = arith.constant 0 : index
    %c0_15 = arith.constant 0 : index
    %c0_16 = arith.constant 0 : index
    %34 = vector.load %arg2[%c0_14, %c0_15, %c0_16] : memref<9x4x4xf32, #tpu.memory_space<vmem>>, vector<1x4x4xf32>
    %35 = vector.shape_cast %34 : vector<1x4x4xf32> to vector<4x4xf32>
    %cst_17 = arith.constant dense<0.000000e+00> : vector<4x256xf32>
    %36 = tpu.matmul %35, %33, %cst_17 {dimension_numbers = #tpu.dot_dimension_numbers<[1], [0], [0], [1], [0, 0, 1, 1], [], []>} : vector<4x4xf32>, vector<4x256xf32>, vector<4x256xf32> -> vector<4x256xf32>
    %37 = arith.addf %30, %36 : vector<4x256xf32>
    %c0_18 = arith.constant 0 : index
    %c96 = arith.constant 96 : index
    %38 = vector.load %arg7[%c0_18, %c96] : memref<4x512xf32, #tpu.memory_space<vmem>>, vector<4x256xf32>
    %c1 = arith.constant 1 : index
    %c0_19 = arith.constant 0 : index
    %c0_20 = arith.constant 0 : index
    %39 = vector.load %arg2[%c1, %c0_19, %c0_20] : memref<9x4x4xf32, #tpu.memory_space<vmem>>, vector<1x4x4xf32>
    %40 = vector.shape_cast %39 : vector<1x4x4xf32> to vector<4x4xf32>
    %cst_21 = arith.constant dense<0.000000e+00> : vector<4x256xf32>
    %41 = tpu.matmul %40, %38, %cst_21 {dimension_numbers = #tpu.dot_dimension_numbers<[1], [0], [0], [1], [0, 0, 1, 1], [], []>} : vector<4x4xf32>, vector<4x256xf32>, vector<4x256xf32> -> vector<4x256xf32>
    %42 = arith.addf %37, %41 : vector<4x256xf32>
    %c0_22 = arith.constant 0 : index
    %c98 = arith.constant 98 : index
    %43 = vector.load %arg7[%c0_22, %c98] : memref<4x512xf32, #tpu.memory_space<vmem>>, vector<4x256xf32>
    %cst_23 = arith.constant 0.000000e+00 : f32
    %44 = vector.broadcast %cst_23 : f32 to vector<4x256xf32>
    %45 = arith.select %27, %43, %44 : vector<4x256xi1>, vector<4x256xf32>
    %c2 = arith.constant 2 : index
    %c0_24 = arith.constant 0 : index
    %c0_25 = arith.constant 0 : index
    %46 = vector.load %arg2[%c2, %c0_24, %c0_25] : memref<9x4x4xf32, #tpu.memory_space<vmem>>, vector<1x4x4xf32>
    %47 = vector.shape_cast %46 : vector<1x4x4xf32> to vector<4x4xf32>
    %cst_26 = arith.constant dense<0.000000e+00> : vector<4x256xf32>
    %48 = tpu.matmul %47, %45, %cst_26 {dimension_numbers = #tpu.dot_dimension_numbers<[1], [0], [0], [1], [0, 0, 1, 1], [], []>} : vector<4x4xf32>, vector<4x256xf32>, vector<4x256xf32> -> vector<4x256xf32>
    %49 = arith.addf %42, %48 : vector<4x256xf32>
    %c0_27 = arith.constant 0 : index
    %c126 = arith.constant 126 : index
    %50 = vector.load %arg7[%c0_27, %c126] : memref<4x512xf32, #tpu.memory_space<vmem>>, vector<4x256xf32>
    %cst_28 = arith.constant 0.000000e+00 : f32
    %51 = vector.broadcast %cst_28 : f32 to vector<4x256xf32>
    %52 = arith.select %25, %50, %51 : vector<4x256xi1>, vector<4x256xf32>
    %c3 = arith.constant 3 : index
    %c0_29 = arith.constant 0 : index
    %c0_30 = arith.constant 0 : index
    %53 = vector.load %arg2[%c3, %c0_29, %c0_30] : memref<9x4x4xf32, #tpu.memory_space<vmem>>, vector<1x4x4xf32>
    %54 = vector.shape_cast %53 : vector<1x4x4xf32> to vector<4x4xf32>
    %cst_31 = arith.constant dense<0.000000e+00> : vector<4x256xf32>
    %55 = tpu.matmul %54, %52, %cst_31 {dimension_numbers = #tpu.dot_dimension_numbers<[1], [0], [0], [1], [0, 0, 1, 1], [], []>} : vector<4x4xf32>, vector<4x256xf32>, vector<4x256xf32> -> vector<4x256xf32>
    %56 = arith.addf %49, %55 : vector<4x256xf32>
    %c0_32 = arith.constant 0 : index
    %c128_33 = arith.constant 128 : index
    %57 = vector.load %arg7[%c0_32, %c128_33] : memref<4x512xf32, #tpu.memory_space<vmem>>, vector<4x256xf32>
    %c4 = arith.constant 4 : index
    %c0_34 = arith.constant 0 : index
    %c0_35 = arith.constant 0 : index
    %58 = vector.load %arg2[%c4, %c0_34, %c0_35] : memref<9x4x4xf32, #tpu.memory_space<vmem>>, vector<1x4x4xf32>
    %59 = vector.shape_cast %58 : vector<1x4x4xf32> to vector<4x4xf32>
    %cst_36 = arith.constant dense<0.000000e+00> : vector<4x256xf32>
    %60 = tpu.matmul %59, %57, %cst_36 {dimension_numbers = #tpu.dot_dimension_numbers<[1], [0], [0], [1], [0, 0, 1, 1], [], []>} : vector<4x4xf32>, vector<4x256xf32>, vector<4x256xf32> -> vector<4x256xf32>
    %61 = arith.addf %56, %60 : vector<4x256xf32>
    %c0_37 = arith.constant 0 : index
    %c130 = arith.constant 130 : index
    %62 = vector.load %arg7[%c0_37, %c130] : memref<4x512xf32, #tpu.memory_space<vmem>>, vector<4x256xf32>
    %cst_38 = arith.constant 0.000000e+00 : f32
    %63 = vector.broadcast %cst_38 : f32 to vector<4x256xf32>
    %64 = arith.select %27, %62, %63 : vector<4x256xi1>, vector<4x256xf32>
    %c5 = arith.constant 5 : index
    %c0_39 = arith.constant 0 : index
    %c0_40 = arith.constant 0 : index
    %65 = vector.load %arg2[%c5, %c0_39, %c0_40] : memref<9x4x4xf32, #tpu.memory_space<vmem>>, vector<1x4x4xf32>
    %66 = vector.shape_cast %65 : vector<1x4x4xf32> to vector<4x4xf32>
    %cst_41 = arith.constant dense<0.000000e+00> : vector<4x256xf32>
    %67 = tpu.matmul %66, %64, %cst_41 {dimension_numbers = #tpu.dot_dimension_numbers<[1], [0], [0], [1], [0, 0, 1, 1], [], []>} : vector<4x4xf32>, vector<4x256xf32>, vector<4x256xf32> -> vector<4x256xf32>
    %68 = arith.addf %61, %67 : vector<4x256xf32>
    %c0_42 = arith.constant 0 : index
    %c158 = arith.constant 158 : index
    %69 = vector.load %arg7[%c0_42, %c158] : memref<4x512xf32, #tpu.memory_space<vmem>>, vector<4x256xf32>
    %cst_43 = arith.constant 0.000000e+00 : f32
    %70 = vector.broadcast %cst_43 : f32 to vector<4x256xf32>
    %71 = arith.select %25, %69, %70 : vector<4x256xi1>, vector<4x256xf32>
    %c6 = arith.constant 6 : index
    %c0_44 = arith.constant 0 : index
    %c0_45 = arith.constant 0 : index
    %72 = vector.load %arg2[%c6, %c0_44, %c0_45] : memref<9x4x4xf32, #tpu.memory_space<vmem>>, vector<1x4x4xf32>
    %73 = vector.shape_cast %72 : vector<1x4x4xf32> to vector<4x4xf32>
    %cst_46 = arith.constant dense<0.000000e+00> : vector<4x256xf32>
    %74 = tpu.matmul %73, %71, %cst_46 {dimension_numbers = #tpu.dot_dimension_numbers<[1], [0], [0], [1], [0, 0, 1, 1], [], []>} : vector<4x4xf32>, vector<4x256xf32>, vector<4x256xf32> -> vector<4x256xf32>
    %75 = arith.addf %68, %74 : vector<4x256xf32>
    %c0_47 = arith.constant 0 : index
    %c160 = arith.constant 160 : index
    %76 = vector.load %arg7[%c0_47, %c160] : memref<4x512xf32, #tpu.memory_space<vmem>>, vector<4x256xf32>
    %c7 = arith.constant 7 : index
    %c0_48 = arith.constant 0 : index
    %c0_49 = arith.constant 0 : index
    %77 = vector.load %arg2[%c7, %c0_48, %c0_49] : memref<9x4x4xf32, #tpu.memory_space<vmem>>, vector<1x4x4xf32>
    %78 = vector.shape_cast %77 : vector<1x4x4xf32> to vector<4x4xf32>
    %cst_50 = arith.constant dense<0.000000e+00> : vector<4x256xf32>
    %79 = tpu.matmul %78, %76, %cst_50 {dimension_numbers = #tpu.dot_dimension_numbers<[1], [0], [0], [1], [0, 0, 1, 1], [], []>} : vector<4x4xf32>, vector<4x256xf32>, vector<4x256xf32> -> vector<4x256xf32>
    %80 = arith.addf %75, %79 : vector<4x256xf32>
    %c0_51 = arith.constant 0 : index
    %c162 = arith.constant 162 : index
    %81 = vector.load %arg7[%c0_51, %c162] : memref<4x512xf32, #tpu.memory_space<vmem>>, vector<4x256xf32>
    %cst_52 = arith.constant 0.000000e+00 : f32
    %82 = vector.broadcast %cst_52 : f32 to vector<4x256xf32>
    %83 = arith.select %27, %81, %82 : vector<4x256xi1>, vector<4x256xf32>
    %c8 = arith.constant 8 : index
    %c0_53 = arith.constant 0 : index
    %c0_54 = arith.constant 0 : index
    %84 = vector.load %arg2[%c8, %c0_53, %c0_54] : memref<9x4x4xf32, #tpu.memory_space<vmem>>, vector<1x4x4xf32>
    %85 = vector.shape_cast %84 : vector<1x4x4xf32> to vector<4x4xf32>
    %cst_55 = arith.constant dense<0.000000e+00> : vector<4x256xf32>
    %86 = tpu.matmul %85, %83, %cst_55 {dimension_numbers = #tpu.dot_dimension_numbers<[1], [0], [0], [1], [0, 0, 1, 1], [], []>} : vector<4x4xf32>, vector<4x256xf32>, vector<4x256xf32> -> vector<4x256xf32>
    %87 = arith.addf %80, %86 : vector<4x256xf32>
    %cst_56 = arith.constant 0.000000e+00 : f32
    %88 = vector.broadcast %cst_56 : f32 to vector<4x256xf32>
    %89 = arith.maximumf %87, %88 : vector<4x256xf32>
    %c0_57 = arith.constant 0 : index
    %c0_58 = arith.constant 0 : index
    %90 = vector.load %arg4[%c0_57, %c0_58] : memref<4x4xf32, #tpu.memory_space<vmem>>, vector<4x4xf32>
    %cst_59 = arith.constant dense<0.000000e+00> : vector<4x256xf32>
    %91 = tpu.matmul %90, %89, %cst_59 {dimension_numbers = #tpu.dot_dimension_numbers<[1], [0], [0], [1], [0, 0, 1, 1], [], []>} : vector<4x4xf32>, vector<4x256xf32>, vector<4x256xf32> -> vector<4x256xf32>
    %c0_60 = arith.constant 0 : index
    %c0_61 = arith.constant 0 : index
    %92 = vector.load %arg5[%c0_60, %c0_61] : memref<4x1xf32, #tpu.memory_space<vmem>>, vector<4x1xf32>
    %93 = vector.broadcast %92 : vector<4x1xf32> to vector<4x256xf32>
    %94 = arith.addf %91, %93 : vector<4x256xf32>
    %95 = arith.addf %1, %94 : vector<4x256xf32>
    %c0_62 = arith.constant 0 : index
    %c0_63 = arith.constant 0 : index
    %c0_64 = arith.constant 0 : index
    %96 = vector.load %arg6[%c0_62, %c0_63, %c0_64] : memref<1x4x256xf32, #tpu.memory_space<vmem>>, vector<1x4x256xf32>
    %97 = vector.shape_cast %96 : vector<1x4x256xf32> to vector<4x256xf32>
    %98 = vector.shape_cast %95 : vector<4x256xf32> to vector<1x4x256xf32>
    tpu.vector_store %arg6[%c0_62, %c0_63, %c0_64], %98 {strides = array<i32>} : memref<1x4x256xf32, #tpu.memory_space<vmem>>, vector<1x4x256xf32>,
    return
  }
  func.func @transform_0(%arg0: i32) -> (i32, i32, i32) {
    %c0_i32 = arith.constant 0 : i32
    %c0_i32_0 = arith.constant 0 : i32
    %c0_i32_1 = arith.constant 0 : i32
    return %arg0, %c0_i32, %c0_i32_0 : i32, i32, i32
  }
  func.func @transform_1(%arg0: i32) -> (i32, i32, i32) {
    %c0_i32 = arith.constant 0 : i32
    %c0_i32_0 = arith.constant 0 : i32
    %c0_i32_1 = arith.constant 0 : i32
    %c0_i32_2 = arith.constant 0 : i32
    return %c0_i32, %c0_i32_0, %c0_i32_1 : i32, i32, i32
  }
  func.func @transform_2(%arg0: i32) -> (i32, i32) {
    %c0_i32 = arith.constant 0 : i32
    %c0_i32_0 = arith.constant 0 : i32
    %c0_i32_1 = arith.constant 0 : i32
    return %c0_i32, %c0_i32_0 : i32, i32
  }
  func.func @transform_3(%arg0: i32) -> (i32, i32) {
    %c0_i32 = arith.constant 0 : i32
    %c0_i32_0 = arith.constant 0 : i32
    %c0_i32_1 = arith.constant 0 : i32
    return %c0_i32, %c0_i32_0 : i32, i32
  }
  func.func @transform_4(%arg0: i32) -> (i32, i32) {
    %c0_i32 = arith.constant 0 : i32
    %c0_i32_0 = arith.constant 0 : i32
    %c0_i32_1 = arith.constant 0 : i32
    return %c0_i32, %c0_i32_0 : i32, i32
  }
  func.func @transform_5(%arg0: i32) -> (i32, i32, i32) {
    %c0_i32 = arith.constant 0 : i32
    %c0_i32_0 = arith.constant 0 : i32
    %c0_i32_1 = arith.constant 0 : i32
    return %arg0, %c0_i32, %c0_i32_0 : i32, i32, i32
  }
}

</mosaic_0001>

<llo_original>
// kernel: tpu_custom_call.1
$region0: #{tpu_custom_call.1}
  #allocation0 [shape = 'u32[]', space=smem, size = 0x4, offset = 0x4, fixed_abs, tag = 'smem constant byte address 0x4 - core index']
  #allocation1 [shape = 'u32[144,128]{1,0:T(1,128)}', space=vmem, size = 0x12000, scoped, tag = 'internal scratch']
  #allocation2 [shape = 'f32[4,512]{1,0:T(4,128)}', space=vmem, size = 0x2000, scoped, tag = 'scratch operand']
  %s0 = inlined_call_operand.vmem [shape: f32[2,4,256], index: 0, kind: input, shape index: {}]
  %s1 = inlined_call_operand.vmem [shape: f32[9,4,4], index: 1, kind: input, shape index: {}]
  %s2 = inlined_call_operand.vmem [shape: f32[4,1], index: 2, kind: input, shape index: {}]
  %s3 = inlined_call_operand.vmem [shape: f32[4,4], index: 3, kind: input, shape index: {}]
  %s4 = inlined_call_operand.vmem [shape: f32[4,1], index: 4, kind: input, shape index: {}]
  %s5 = inlined_call_operand.hbm [shape: f32[2,4,256], index: 5, kind: output, shape index: {}]
  %s6 = sld [smem:[#allocation0]]
  $region53: #{tpu_custom_call.1} parent=0
    _
  %s8 = ssub.s32 1, %s6
  %s9 = scalar_select 0, %s8, %s6
  $region1: #{tpu_custom_call.1} parent=0
    #allocation3 [shape = 'u8[8192]{0}', space=vmem, size = 0x2000, scoped, tag = 'output window, operand 0']
    #allocation4 [shape = 's32[2]{0}', space=sflag, size = 0x8, scoped, tag = 'scoped memory for tpu_custom_call.1']
    %10 = vsyncpa [#allocation4], 0
    %s11 = scalar_lea.sflag [#allocation4], 1
    %12 = vsyncpa %s11, 0
    loop: start=0, step=1, limit=4
    $region2: #{tpu_custom_call.1} parent=1 // loop_pre_header
      _
    $region3: #{tpu_custom_call.1} parent=1 // loop_header
      %s14 = sphi 0, %s18
      %p15 = scmp.ge.s32.totalorder %s14, 4
      %s24 = sphi 0, %s26
      %s27 = sphi 0, %s24
      %s28 = sphi 0, %s27
      %s44 = sphi 0, %s28
      %s48 = sphi 0, %s48
      %s50 = sphi 0, %s48
      %s51 = sphi 0, %s50
      %s65 = sphi 0, %s51
      %s69 = sphi 0, %s69
      %s71 = sphi 0, %s69
      %s72 = sphi 0, %s71
      %s86 = sphi 0, %s72
      %s90 = sphi 0, %s90
      %s92 = sphi 0, %s90
      %s93 = sphi 0, %s92
      %s107 = sphi 0, %s93
      %s111 = sphi 0, %s111
      %s113 = sphi 0, %s111
      %s114 = sphi 0, %s113
      %s128 = sphi 0, %s114
      %s134 = sphi 0, %s136
      %s137 = sphi 0, %s134
      %s138 = sphi 0, %s137
      %s154 = sphi 0, %s138
    $region4: #{tpu_custom_call.1} parent=1 // loop_header_branch
      %17 = sbr.rel (%p15) target = $region8
    $region5: #{tpu_custom_call.1} parent=1 // loop_body
      %s19 = ssub.s32 %s14, 1
      %s20 = ssub.s32 %s14, 2
      %s21 = sadd.s32 %s14, 1
      %s22 = ssub.s32 %s14, %s21
      %p23 = scmp.eq.s32.totalorder %s22, 0
      %s25 = sadd.s32 %s24, 1
      %s26 = scalar_select %p23, %s24, %s25
      %p29 = pneg %p23
      %p30 = scmp.eq.s32.totalorder %s14, 1
      %p31 = por %p29, %p30
      %p32 = scmp.ne.s32.totalorder %s24, %s27
      %p33 = scmp.eq.s32.totalorder %s14, 0
      %p34 = por %p32, %p33
      %p35 = scmp.ne.s32.totalorder %s24, %s27
      %p36 = scmp.eq.s32.totalorder %s19, 1
      %p37 = por %p35, %p36
      %p38 = scmp.ne.s32.totalorder %s27, %s28
      %p39 = scmp.eq.s32.totalorder %s19, 0
      %p40 = por %p38, %p39
      %p41 = scmp.ne.s32.totalorder %s27, %s28
      %p42 = scmp.eq.s32.totalorder %s20, 1
      %p43 = por %p41, %p42
      %p45 = scmp.ne.s32.totalorder %s28, %s44
      %p46 = scmp.eq.s32.totalorder %s20, 0
      %p47 = por %p45, %p46
      %s49 = sadd.s32 %s48, 1
      %p52 = scmp.eq.s32.totalorder %s14, 1
      %p53 = scmp.ne.s32.totalorder %s48, %s50
      %p54 = scmp.eq.s32.totalorder %s14, 0
      %p55 = por %p53, %p54
      %p56 = scmp.ne.s32.totalorder %s48, %s50
      %p57 = scmp.eq.s32.totalorder %s19, 1
      %p58 = por %p56, %p57
      %p59 = scmp.ne.s32.totalorder %s50, %s51
      %p60 = scmp.eq.s32.totalorder %s19, 0
      %p61 = por %p59, %p60
      %p62 = scmp.ne.s32.totalorder %s50, %s51
      %p63 = scmp.eq.s32.totalorder %s20, 1
      %p64 = por %p62, %p63
      %p66 = scmp.ne.s32.totalorder %s51, %s65
      %p67 = scmp.eq.s32.totalorder %s20, 0
      %p68 = por %p66, %p67
      %s70 = sadd.s32 %s69, 1
      %p73 = scmp.eq.s32.totalorder %s14, 1
      %p74 = scmp.ne.s32.totalorder %s69, %s71
      %p75 = scmp.eq.s32.totalorder %s14, 0
      %p76 = por %p74, %p75
      %p77 = scmp.ne.s32.totalorder %s69, %s71
      %p78 = scmp.eq.s32.totalorder %s19, 1
      %p79 = por %p77, %p78
      %p80 = scmp.ne.s32.totalorder %s71, %s72
      %p81 = scmp.eq.s32.totalorder %s19, 0
      %p82 = por %p80, %p81
      %p83 = scmp.ne.s32.totalorder %s71, %s72
      %p84 = scmp.eq.s32.totalorder %s20, 1
      %p85 = por %p83, %p84
      %p87 = scmp.ne.s32.totalorder %s72, %s86
      %p88 = scmp.eq.s32.totalorder %s20, 0
      %p89 = por %p87, %p88
      %s91 = sadd.s32 %s90, 1
      %p94 = scmp.eq.s32.totalorder %s14, 1
      %p95 = scmp.ne.s32.totalorder %s90, %s92
      %p96 = scmp.eq.s32.totalorder %s14, 0
      %p97 = por %p95, %p96
      %p98 = scmp.ne.s32.totalorder %s90, %s92
      %p99 = scmp.eq.s32.totalorder %s19, 1
      %p100 = por %p98, %p99
      %p101 = scmp.ne.s32.totalorder %s92, %s93
      %p102 = scmp.eq.s32.totalorder %s19, 0
      %p103 = por %p101, %p102
      %p104 = scmp.ne.s32.totalorder %s92, %s93
      %p105 = scmp.eq.s32.totalorder %s20, 1
      %p106 = por %p104, %p105
      %p108 = scmp.ne.s32.totalorder %s93, %s107
      %p109 = scmp.eq.s32.totalorder %s20, 0
      %p110 = por %p108, %p109
      %s112 = sadd.s32 %s111, 1
      %p115 = scmp.eq.s32.totalorder %s14, 1
      %p116 = scmp.ne.s32.totalorder %s111, %s113
      %p117 = scmp.eq.s32.totalorder %s14, 0
      %p118 = por %p116, %p117
      %p119 = scmp.ne.s32.totalorder %s111, %s113
      %p120 = scmp.eq.s32.totalorder %s19, 1
      %p121 = por %p119, %p120
      %p122 = scmp.ne.s32.totalorder %s113, %s114
      %p123 = scmp.eq.s32.totalorder %s19, 0
      %p124 = por %p122, %p123
      %p125 = scmp.ne.s32.totalorder %s113, %s114
      %p126 = scmp.eq.s32.totalorder %s20, 1
      %p127 = por %p125, %p126
      %p129 = scmp.ne.s32.totalorder %s114, %s128
      %p130 = scmp.eq.s32.totalorder %s20, 0
      %p131 = por %p129, %p130
      %s132 = ssub.s32 %s14, %s21
      %p133 = scmp.eq.s32.totalorder %s132, 0
      %s135 = sadd.s32 %s134, 1
      %s136 = scalar_select %p133, %s134, %s135
      %p139 = pneg %p133
      %p140 = scmp.eq.s32.totalorder %s14, 1
      %p141 = por %p139, %p140
      %p142 = scmp.ne.s32.totalorder %s134, %s137
      %p143 = scmp.eq.s32.totalorder %s14, 0
      %p144 = por %p142, %p143
      %p145 = scmp.ne.s32.totalorder %s134, %s137
      %p146 = scmp.eq.s32.totalorder %s19, 1
      %p147 = por %p145, %p146
      %p148 = scmp.ne.s32.totalorder %s137, %s138
      %p149 = scmp.eq.s32.totalorder %s19, 0
      %p150 = por %p148, %p149
      %p151 = scmp.ne.s32.totalorder %s137, %s138
      %p152 = scmp.eq.s32.totalorder %s20, 1
      %p153 = por %p151, %p152
      %p155 = scmp.ne.s32.totalorder %s138, %s154
      %p156 = scmp.eq.s32.totalorder %s20, 0
      %p157 = por %p155, %p156
      %p158 = scmp.le.s32.totalorder 1, %s14
      %p159 = scmp.lt.s32.totalorder %s14, 3
      %p160 = pnand %p158, %p159
      %p161 = pneg %p160
      // Predicated region
      $region9: #{tpu_custom_call.1} parent=5 // pred_check
        _
      $region10: #{tpu_custom_call.1} parent=5 // pred_check_branch
        %163 = sbr.rel (%p160) target = $region12
      $region11: #{tpu_custom_call.1} parent=5 // pred_region
        %s164 = ssub.s32 %s14, 1
        // Predicated region
        $region13: #{tpu_custom_call.1} parent=11 // pred_check
          %p165 = pneg %p61
        $region14: #{tpu_custom_call.1} parent=11 // pred_check_branch
          %167 = sbr.rel (%p165) target = $region16
        $region15: #{tpu_custom_call.1} parent=11 // pred_region
          _
        $region16: #{tpu_custom_call.1} parent=11 // pred_fallthru
          _
        // Predicated region
        $region17: #{tpu_custom_call.1} parent=11 // pred_check
          %p168 = pneg %p82
        $region18: #{tpu_custom_call.1} parent=11 // pred_check_branch
          %170 = sbr.rel (%p168) target = $region20
        $region19: #{tpu_custom_call.1} parent=11 // pred_region
          _
        $region20: #{tpu_custom_call.1} parent=11 // pred_fallthru
          _
        // Predicated region
        $region21: #{tpu_custom_call.1} parent=11 // pred_check
          %p171 = pneg %p103
        $region22: #{tpu_custom_call.1} parent=11 // pred_check_branch
          %173 = sbr.rel (%p171) target = $region24
        $region23: #{tpu_custom_call.1} parent=11 // pred_region
          _
        $region24: #{tpu_custom_call.1} parent=11 // pred_fallthru
          _
        // Predicated region
        $region25: #{tpu_custom_call.1} parent=11 // pred_check
          %p174 = pneg %p124
        $region26: #{tpu_custom_call.1} parent=11 // pred_check_branch
          %176 = sbr.rel (%p174) target = $region28
        $region27: #{tpu_custom_call.1} parent=11 // pred_region
          _
        $region28: #{tpu_custom_call.1} parent=11 // pred_fallthru
          _
      $region12: #{tpu_custom_call.1} parent=5 // pred_fallthru
        _
      %p177 = scmp.lt.s32.totalorder %s14, 2
      // Predicated region
      $region29: #{tpu_custom_call.1} parent=5 // pred_check
        %p178 = pneg %p177
      $region30: #{tpu_custom_call.1} parent=5 // pred_check_branch
        %180 = sbr.rel (%p178) target = $region32
      $region31: #{tpu_custom_call.1} parent=5 // pred_region
        // Predicated region
        $region33: #{tpu_custom_call.1} parent=31 // pred_check
          %p181 = pneg %p34
        $region34: #{tpu_custom_call.1} parent=31 // pred_check_branch
          %183 = sbr.rel (%p181) target = $region36
        $region35: #{tpu_custom_call.1} parent=31 // pred_region
          %p184 = scmp.lt.s32.totalorder %s14, 1
          %s185 = scalar_select %p184, %s14, 1
          %s186 = smul.addr %s185, 2
          %s187 = smul.addr %s186, 4
          %s188 = scalar_lea.vmem %s0, %s187
        $region36: #{tpu_custom_call.1} parent=31 // pred_fallthru
          _
      $region32: #{tpu_custom_call.1} parent=5 // pred_fallthru
        _
      %p189 = scmp.le.s32.totalorder 1, %s14
      %p190 = scmp.lt.s32.totalorder %s14, 3
      %p191 = pnand %p189, %p190
      %p192 = pneg %p191
      // Predicated region
      $region37: #{tpu_custom_call.1} parent=5 // pred_check
        _
      $region38: #{tpu_custom_call.1} parent=5 // pred_check_branch
        %194 = sbr.rel (%p191) target = $region40
      $region39: #{tpu_custom_call.1} parent=5 // pred_region
        %s195 = ssub.s32 %s14, 1
        %p196 = scmp.lt.s32.totalorder %s19, 1
        %s197 = scalar_select %p196, %s19, 1
        %s198 = smul.addr %s197, 2
        %s199 = smul.addr %s198, 4
        %s200 = scalar_lea.vmem %s0, %s199
        %p201 = pneg %p40
        %p202 = pneg %p37
        %p203 = pneg %p61
        %p204 = pneg %p58
        %p205 = pneg %p82
        %p206 = pneg %p79
        %p207 = pneg %p103
        %p208 = pneg %p100
        %p209 = pneg %p124
        %p210 = pneg %p121
        %p211 = pneg %p150
        %p212 = pneg %p147
        %s213 = sand.u32 %s137, 1
        %s214 = scalar_lea.sflag [#allocation4], %s213
        %s215 = sand.u32 %s137, 1
        %s216 = smul.addr %s215, 8
        %s217 = scalar_lea.vmem [#allocation3], %s216
        %p218 = scmp.lt.s32.totalorder %s19, 1
        %s219 = scalar_select %p218, %s19, 1
        %s220 = smul.addr %s219, 2
        %s221 = smul.addr %s220, 4
        %s222 = scalar_lea.vmem %s0, %s221
        %v223 = vld [vmem:[%s222] sm:$0xff]
        %224 = vst [vmem:[#allocation2] sm:$0xf] 0.0
        %225 = vst [vmem:[#allocation2 + $0xc] sm:$0xf] 0.0
        %226 = vst [vmem:[#allocation2 + $0x4] sm:$0xff] %v223
        %v227 = vlaneseq
        %v228 = vand.u32 %v227, 127
        %v229 = vadd.s32 %v228, 128
        %vm230 = vcmp.lt.s32.totalorder %v228, 0
        %v231 = vsub.s32 0, %v228
        %v232 = vsel %vm230, %v231, %v228
        %v233 = vshrl.u32 %v232, 4
        %v234 = vand.u32 %v232, 15
        %v235 = vsub.s32 0, %v234
        %v236 = vsel %vm230, %v235, %v234
        %vm237 = vcmp.lt.s32.totalorder %v229, 0
        %v238 = vsub.s32 0, %v229
        %v239 = vsel %vm237, %v238, %v229
        %v240 = vshrl.u32 %v239, 4
        %v241 = vand.u32 %v239, 15
        %v242 = vsub.s32 0, %v241
        %v243 = vsel %vm237, %v242, %v241
        %vm244 = vcmp.ne.s32.totalorder %v236, 0
        %vm245 = vcmp.ne.s32.totalorder %v243, 0
        %vm246 = vcmp.lt.s32.totalorder %v236, 0
        %vm247 = vcmp.lt.s32.totalorder %v243, 0
        %vm248 = vmand %vm246, %vm244
        %vm249 = vmand %vm247, %vm245
        %v250 = vadd.s32 %v236, 16
        %v251 = vadd.s32 %v243, 16
        %v252 = vsel %vm248, %v250, %v236
        %v253 = vsel %vm249, %v251, %v243
        %vm254 = vcmp.ge.s32.totalorder %v252, 2
        %vm255 = vcmp.ge.s32.totalorder %v253, 2
        %vm256 = vcmp.lt.s32.totalorder %v252, 14
        %vm257 = vcmp.lt.s32.totalorder %v253, 14
        %v258 = vld [vmem:[%s2] sm:$0xf]
        %260 = vset.pattern.permute.xlu0 0
        %261 = vperm.xlu0 %260, %v258
        %v262 = vpop.permute.xlu0 %261
        %v264 = vld [vmem:[#allocation2] sm:$0xff]
        %v265 = vld [vmem:[#allocation2 + $0x8] sm:$0xf]
        %v268 = vcombine.high %v264, %v264
        %269 = vrot.lane.b32.xlu0 %v264, 34
        %v270 = vpop.permute.xlu0 %269
        %271 = vrot.lane.b32.xlu0 %v268, 34
        %v272 = vpop.permute.xlu0 %271
        %273 = vrot.lane.b32.xlu0 %v265, 34
        %v274 = vpop.permute.xlu0 %273
        %vm275 = vcmask 277504
        %v276 = vsel %vm275, %v270, %v272
        %v277 = vsel %vm275, %v272, %v274
        %v280 = vsel %vm254, %v276, 0.0
        %v281 = vsel %vm255, %v277, 0.0
        %v282 = vld [vmem:[%s1] sm:$0xf]
        %vm283 = vcmask 31744
        %v285 = vsel %vm283, %v282, 0
        %vm287 = vcmask 1043456
        %v289 = vsel %vm287, %v280, 0
        %v292 = vsel %vm287, %v281, 0
        %294 = vmatprep.subr.mxu0 %v292
        %295 = vmatpush1.msra.mxu0 %v289
        %296 = vmatprep.subr.mxu0 0.0
        %297 = vmatpush1.msra.mxu0 0.0
        %298 = vmatprep.subr.mxu0 0.0
        %299 = vmatpush1.msra.mxu0 0.0
        %300 = vmatprep.subr.mxu0 0.0
        %301 = vmatpush1.msra.mxu0 0.0
        %302 = vmatprep.subr.mxu0 0.0
        %303 = vmatpush1.msra.mxu0 0.0
        %304 = vmatprep.subr.mxu0 0.0
        %305 = vmatpush1.msra.mxu0 0.0
        %306 = vmatprep.subr.mxu0 0.0
        %307 = vmatpush1.msra.mxu0 0.0
        %308 = vmatprep.subr.mxu0 0.0
        %309 = vmatpush1.msra.mxu0 0.0
        %310 = vmatprep.subr.mxu0 0.0
        %311 = vmatpush1.msra.mxu0 0.0
        %312 = vmatprep.subr.mxu0 0.0
        %313 = vmatpush1.msra.mxu0 0.0
        %314 = vmatprep.subr.mxu0 0.0
        %315 = vmatpush1.msra.mxu0 0.0
        %316 = vmatprep.subr.mxu0 0.0
        %317 = vmatpush1.msra.mxu0 0.0
        %318 = vmatprep.subr.mxu0 0.0
        %319 = vmatpush1.msra.mxu0 0.0
        %320 = vmatprep.subr.mxu0 0.0
        %321 = vmatpush1.msra.mxu0 0.0
        %322 = vmatprep.subr.mxu0 0.0
        %323 = vmatpush1.msra.mxu0 0.0
        %324 = vmatprep.subr.mxu0 0.0
        %325 = vmatpush1.msra.mxu0 0.0
        %326 = vmatprep.subr.mxu0 0.0
        %327 = vmatpush1.msra.mxu0 0.0
        %328 = vmatprep.subr.mxu0 0.0
        %329 = vmatpush1.msra.mxu0 0.0
        %330 = vmatprep.subr.mxu0 0.0
        %331 = vmatpush1.msra.mxu0 0.0
        %332 = vmatprep.subr.mxu0 0.0
        %333 = vmatpush1.msra.mxu0 0.0
        %334 = vmatprep.subr.mxu0 0.0
        %335 = vmatpush1.msra.mxu0 0.0
        %336 = vmatprep.subr.mxu0 0.0
        %337 = vmatpush1.msra.mxu0 0.0
        %338 = vmatprep.subr.mxu0 0.0
        %339 = vmatpush1.msra.mxu0 0.0
        %340 = vmatprep.subr.mxu0 0.0
        %341 = vmatpush1.msra.mxu0 0.0
        %342 = vmatprep.subr.mxu0 0.0
        %343 = vmatpush1.msra.mxu0 0.0
        %344 = vmatprep.subr.mxu0 0.0
        %345 = vmatpush1.msra.mxu0 0.0
        %346 = vmatprep.subr.mxu0 0.0
        %347 = vmatpush1.msra.mxu0 0.0
        %348 = vmatprep.subr.mxu0 0.0
        %349 = vmatpush1.msra.mxu0 0.0
        %350 = vmatprep.subr.mxu0 0.0
        %351 = vmatpush1.msra.mxu0 0.0
        %352 = vmatprep.subr.mxu0 0.0
        %353 = vmatpush1.msra.mxu0 0.0
        %354 = vmatprep.subr.mxu0 0.0
        %355 = vmatpush1.msra.mxu0 0.0
        %356 = vmatprep.subr.mxu0 0.0
        %357 = vmatpush1.msra.mxu0 0.0
        %358 = vmatprep.mubr.f32.mxu0 0.0
        %359 = vmatmul.mubr.f32.gmra.mrb[0].mxu0 %v285
        %v360 = vpop.f32.mrb[0].mxu0
        %v361 = vadd.f32 0.0, %v360
        %v362 = vpop.f32.mrb[0].mxu0
        %v363 = vadd.f32 0.0, %v362
        %364 = vdwg.mxu0
        %v365 = vadd.f32 %v262, %v361
        %v366 = vadd.f32 %v262, %v363
        %v367 = vld [vmem:[#allocation2] sm:$0xff]
        %v368 = vld [vmem:[#allocation2 + $0x8] sm:$0xf]
        %s369 = scalar_lea.vmem %s1, 4
        %v370 = vld [vmem:[%s369] sm:$0xf]
        %v373 = vcombine.high %v367, %v367
        %374 = vrot.lane.b32.xlu0 %v367, 32
        %v375 = vpop.permute.xlu0 %374
        %376 = vrot.lane.b32.xlu0 %v373, 32
        %v377 = vpop.permute.xlu0 %376
        %378 = vrot.lane.b32.xlu0 %v368, 32
        %v379 = vpop.permute.xlu0 %378
        %vm380 = vcmask 261120
        %v381 = vsel %vm380, %v375, %v377
        %v382 = vsel %vm380, %v377, %v379
        %v384 = vsel %vm283, %v370, 0
        %v386 = vsel %vm287, %v381, 0
        %v388 = vsel %vm287, %v382, 0
        %390 = vmatprep.subr.mxu0 %v388
        %391 = vmatpush1.msra.mxu0 %v386
        %392 = vmatprep.subr.mxu0 0.0
        %393 = vmatpush1.msra.mxu0 0.0
        %394 = vmatprep.subr.mxu0 0.0
        %395 = vmatpush1.msra.mxu0 0.0
        %396 = vmatprep.subr.mxu0 0.0
        %397 = vmatpush1.msra.mxu0 0.0
        %398 = vmatprep.subr.mxu0 0.0
        %399 = vmatpush1.msra.mxu0 0.0
        %400 = vmatprep.subr.mxu0 0.0
        %401 = vmatpush1.msra.mxu0 0.0
        %402 = vmatprep.subr.mxu0 0.0
        %403 = vmatpush1.msra.mxu0 0.0
        %404 = vmatprep.subr.mxu0 0.0
        %405 = vmatpush1.msra.mxu0 0.0
        %406 = vmatprep.subr.mxu0 0.0
        %407 = vmatpush1.msra.mxu0 0.0
        %408 = vmatprep.subr.mxu0 0.0
        %409 = vmatpush1.msra.mxu0 0.0
        %410 = vmatprep.subr.mxu0 0.0
        %411 = vmatpush1.msra.mxu0 0.0
        %412 = vmatprep.subr.mxu0 0.0
        %413 = vmatpush1.msra.mxu0 0.0
        %414 = vmatprep.subr.mxu0 0.0
        %415 = vmatpush1.msra.mxu0 0.0
        %416 = vmatprep.subr.mxu0 0.0
        %417 = vmatpush1.msra.mxu0 0.0
        %418 = vmatprep.subr.mxu0 0.0
        %419 = vmatpush1.msra.mxu0 0.0
        %420 = vmatprep.subr.mxu0 0.0
        %421 = vmatpush1.msra.mxu0 0.0
        %422 = vmatprep.subr.mxu0 0.0
        %423 = vmatpush1.msra.mxu0 0.0
        %424 = vmatprep.subr.mxu0 0.0
        %425 = vmatpush1.msra.mxu0 0.0
        %426 = vmatprep.subr.mxu0 0.0
        %427 = vmatpush1.msra.mxu0 0.0
        %428 = vmatprep.subr.mxu0 0.0
        %429 = vmatpush1.msra.mxu0 0.0
        %430 = vmatprep.subr.mxu0 0.0
        %431 = vmatpush1.msra.mxu0 0.0
        %432 = vmatprep.subr.mxu0 0.0
        %433 = vmatpush1.msra.mxu0 0.0
        %434 = vmatprep.subr.mxu0 0.0
        %435 = vmatpush1.msra.mxu0 0.0
        %436 = vmatprep.subr.mxu0 0.0
        %437 = vmatpush1.msra.mxu0 0.0
        %438 = vmatprep.subr.mxu0 0.0
        %439 = vmatpush1.msra.mxu0 0.0
        %440 = vmatprep.subr.mxu0 0.0
        %441 = vmatpush1.msra.mxu0 0.0
        %442 = vmatprep.subr.mxu0 0.0
        %443 = vmatpush1.msra.mxu0 0.0
        %444 = vmatprep.subr.mxu0 0.0
        %445 = vmatpush1.msra.mxu0 0.0
        %446 = vmatprep.subr.mxu0 0.0
        %447 = vmatpush1.msra.mxu0 0.0
        %448 = vmatprep.subr.mxu0 0.0
        %449 = vmatpush1.msra.mxu0 0.0
        %450 = vmatprep.subr.mxu0 0.0
        %451 = vmatpush1.msra.mxu0 0.0
        %452 = vmatprep.subr.mxu0 0.0
        %453 = vmatpush1.msra.mxu0 0.0
        %454 = vmatprep.mubr.f32.mxu0 0.0
        %455 = vmatmul.mubr.f32.gmra.mrb[0].mxu0 %v384
        %v456 = vpop.f32.mrb[0].mxu0
        %v457 = vadd.f32 0.0, %v456
        %v458 = vpop.f32.mrb[0].mxu0
        %v459 = vadd.f32 0.0, %v458
        %460 = vdwg.mxu0
        %v461 = vadd.f32 %v365, %v457
        %v462 = vadd.f32 %v366, %v459
        %v463 = vld [vmem:[#allocation2] sm:$0xff]
        %v464 = vld [vmem:[#allocation2 + $0x8] sm:$0xf]
        %v467 = vcombine.high %v463, %v463
        %468 = vrot.lane.b32.xlu0 %v463, 30
        %v469 = vpop.permute.xlu0 %468
        %470 = vrot.lane.b32.xlu0 %v467, 30
        %v471 = vpop.permute.xlu0 %470
        %472 = vrot.lane.b32.xlu0 %v464, 30
        %v473 = vpop.permute.xlu0 %472
        %vm474 = vcmask 244736
        %v475 = vsel %vm474, %v469, %v471
        %v476 = vsel %vm474, %v471, %v473
        %v479 = vsel %vm256, %v475, 0.0
        %v480 = vsel %vm257, %v476, 0.0
        %s481 = scalar_lea.vmem %s1, 8
        %v482 = vld [vmem:[%s481] sm:$0xf]
        %v484 = vsel %vm283, %v482, 0
        %v487 = vsel %vm287, %v479, 0
        %v490 = vsel %vm287, %v480, 0
        %492 = vmatprep.subr.mxu0 %v490
        %493 = vmatpush1.msra.mxu0 %v487
        %494 = vmatprep.subr.mxu0 0.0
        %495 = vmatpush1.msra.mxu0 0.0
        %496 = vmatprep.subr.mxu0 0.0
        %497 = vmatpush1.msra.mxu0 0.0
        %498 = vmatprep.subr.mxu0 0.0
        %499 = vmatpush1.msra.mxu0 0.0
        %500 = vmatprep.subr.mxu0 0.0
        %501 = vmatpush1.msra.mxu0 0.0
        %502 = vmatprep.subr.mxu0 0.0
        %503 = vmatpush1.msra.mxu0 0.0
        %504 = vmatprep.subr.mxu0 0.0
        %505 = vmatpush1.msra.mxu0 0.0
        %506 = vmatprep.subr.mxu0 0.0
        %507 = vmatpush1.msra.mxu0 0.0
        %508 = vmatprep.subr.mxu0 0.0
        %509 = vmatpush1.msra.mxu0 0.0
        %510 = vmatprep.subr.mxu0 0.0
        %511 = vmatpush1.msra.mxu0 0.0
        %512 = vmatprep.subr.mxu0 0.0
        %513 = vmatpush1.msra.mxu0 0.0
        %514 = vmatprep.subr.mxu0 0.0
        %515 = vmatpush1.msra.mxu0 0.0
        %516 = vmatprep.subr.mxu0 0.0
        %517 = vmatpush1.msra.mxu0 0.0
        %518 = vmatprep.subr.mxu0 0.0
        %519 = vmatpush1.msra.mxu0 0.0
        %520 = vmatprep.subr.mxu0 0.0
        %521 = vmatpush1.msra.mxu0 0.0
        %522 = vmatprep.subr.mxu0 0.0
        %523 = vmatpush1.msra.mxu0 0.0
        %524 = vmatprep.subr.mxu0 0.0
        %525 = vmatpush1.msra.mxu0 0.0
        %526 = vmatprep.subr.mxu0 0.0
        %527 = vmatpush1.msra.mxu0 0.0
        %528 = vmatprep.subr.mxu0 0.0
        %529 = vmatpush1.msra.mxu0 0.0
        %530 = vmatprep.subr.mxu0 0.0
        %531 = vmatpush1.msra.mxu0 0.0
        %532 = vmatprep.subr.mxu0 0.0
        %533 = vmatpush1.msra.mxu0 0.0
        %534 = vmatprep.subr.mxu0 0.0
        %535 = vmatpush1.msra.mxu0 0.0
        %536 = vmatprep.subr.mxu0 0.0
        %537 = vmatpush1.msra.mxu0 0.0
        %538 = vmatprep.subr.mxu0 0.0
        %539 = vmatpush1.msra.mxu0 0.0
        %540 = vmatprep.subr.mxu0 0.0
        %541 = vmatpush1.msra.mxu0 0.0
        %542 = vmatprep.subr.mxu0 0.0
        %543 = vmatpush1.msra.mxu0 0.0
        %544 = vmatprep.subr.mxu0 0.0
        %545 = vmatpush1.msra.mxu0 0.0
        %546 = vmatprep.subr.mxu0 0.0
        %547 = vmatpush1.msra.mxu0 0.0
        %548 = vmatprep.subr.mxu0 0.0
        %549 = vmatpush1.msra.mxu0 0.0
        %550 = vmatprep.subr.mxu0 0.0
        %551 = vmatpush1.msra.mxu0 0.0
        %552 = vmatprep.subr.mxu0 0.0
        %553 = vmatpush1.msra.mxu0 0.0
        %554 = vmatprep.subr.mxu0 0.0
        %555 = vmatpush1.msra.mxu0 0.0
        %556 = vmatprep.mubr.f32.mxu0 0.0
        %557 = vmatmul.mubr.f32.gmra.mrb[0].mxu0 %v484
        %v558 = vpop.f32.mrb[0].mxu0
        %v559 = vadd.f32 0.0, %v558
        %v560 = vpop.f32.mrb[0].mxu0
        %v561 = vadd.f32 0.0, %v560
        %562 = vdwg.mxu0
        %v563 = vadd.f32 %v461, %v559
        %v564 = vadd.f32 %v462, %v561
        %v565 = vld [vmem:[#allocation2] sm:$0xff]
        %v566 = vld [vmem:[#allocation2 + $0x8] sm:$0xf]
        %v569 = vcombine.high %v565, %v565
        %570 = vrot.lane.b32.xlu0 %v565, 2
        %v571 = vpop.permute.xlu0 %570
        %572 = vrot.lane.b32.xlu0 %v569, 2
        %v573 = vpop.permute.xlu0 %572
        %574 = vrot.lane.b32.xlu0 %v566, 2
        %v575 = vpop.permute.xlu0 %574
        %vm576 = vcmask 15360
        %v577 = vsel %vm576, %v571, %v573
        %v578 = vsel %vm576, %v573, %v575
        %v581 = vsel %vm254, %v577, 0.0
        %v582 = vsel %vm255, %v578, 0.0
        %s583 = scalar_lea.vmem %s1, 12
        %v584 = vld [vmem:[%s583] sm:$0xf]
        %v586 = vsel %vm283, %v584, 0
        %v589 = vsel %vm287, %v581, 0
        %v592 = vsel %vm287, %v582, 0
        %594 = vmatprep.subr.mxu0 %v592
        %595 = vmatpush1.msra.mxu0 %v589
        %596 = vmatprep.subr.mxu0 0.0
        %597 = vmatpush1.msra.mxu0 0.0
        %598 = vmatprep.subr.mxu0 0.0
        %599 = vmatpush1.msra.mxu0 0.0
        %600 = vmatprep.subr.mxu0 0.0
        %601 = vmatpush1.msra.mxu0 0.0
        %602 = vmatprep.subr.mxu0 0.0
        %603 = vmatpush1.msra.mxu0 0.0
        %604 = vmatprep.subr.mxu0 0.0
        %605 = vmatpush1.msra.mxu0 0.0
        %606 = vmatprep.subr.mxu0 0.0
        %607 = vmatpush1.msra.mxu0 0.0
        %608 = vmatprep.subr.mxu0 0.0
        %609 = vmatpush1.msra.mxu0 0.0
        %610 = vmatprep.subr.mxu0 0.0
        %611 = vmatpush1.msra.mxu0 0.0
        %612 = vmatprep.subr.mxu0 0.0
        %613 = vmatpush1.msra.mxu0 0.0
        %614 = vmatprep.subr.mxu0 0.0
        %615 = vmatpush1.msra.mxu0 0.0
        %616 = vmatprep.subr.mxu0 0.0
        %617 = vmatpush1.msra.mxu0 0.0
        %618 = vmatprep.subr.mxu0 0.0
        %619 = vmatpush1.msra.mxu0 0.0
        %620 = vmatprep.subr.mxu0 0.0
        %621 = vmatpush1.msra.mxu0 0.0
        %622 = vmatprep.subr.mxu0 0.0
        %623 = vmatpush1.msra.mxu0 0.0
        %624 = vmatprep.subr.mxu0 0.0
        %625 = vmatpush1.msra.mxu0 0.0
        %626 = vmatprep.subr.mxu0 0.0
        %627 = vmatpush1.msra.mxu0 0.0
        %628 = vmatprep.subr.mxu0 0.0
        %629 = vmatpush1.msra.mxu0 0.0
        %630 = vmatprep.subr.mxu0 0.0
        %631 = vmatpush1.msra.mxu0 0.0
        %632 = vmatprep.subr.mxu0 0.0
        %633 = vmatpush1.msra.mxu0 0.0
        %634 = vmatprep.subr.mxu0 0.0
        %635 = vmatpush1.msra.mxu0 0.0
        %636 = vmatprep.subr.mxu0 0.0
        %637 = vmatpush1.msra.mxu0 0.0
        %638 = vmatprep.subr.mxu0 0.0
        %639 = vmatpush1.msra.mxu0 0.0
        %640 = vmatprep.subr.mxu0 0.0
        %641 = vmatpush1.msra.mxu0 0.0
        %642 = vmatprep.subr.mxu0 0.0
        %643 = vmatpush1.msra.mxu0 0.0
        %644 = vmatprep.subr.mxu0 0.0
        %645 = vmatpush1.msra.mxu0 0.0
        %646 = vmatprep.subr.mxu0 0.0
        %647 = vmatpush1.msra.mxu0 0.0
        %648 = vmatprep.subr.mxu0 0.0
        %649 = vmatpush1.msra.mxu0 0.0
        %650 = vmatprep.subr.mxu0 0.0
        %651 = vmatpush1.msra.mxu0 0.0
        %652 = vmatprep.subr.mxu0 0.0
        %653 = vmatpush1.msra.mxu0 0.0
        %654 = vmatprep.subr.mxu0 0.0
        %655 = vmatpush1.msra.mxu0 0.0
        %656 = vmatprep.subr.mxu0 0.0
        %657 = vmatpush1.msra.mxu0 0.0
        %658 = vmatprep.mubr.f32.mxu0 0.0
        %659 = vmatmul.mubr.f32.gmra.mrb[0].mxu0 %v586
        %v660 = vpop.f32.mrb[0].mxu0
        %v661 = vadd.f32 0.0, %v660
        %v662 = vpop.f32.mrb[0].mxu0
        %v663 = vadd.f32 0.0, %v662
        %664 = vdwg.mxu0
        %v665 = vadd.f32 %v563, %v661
        %v666 = vadd.f32 %v564, %v663
        %v667 = vld [vmem:[#allocation2 + $0x4] sm:$0xff]
        %s668 = scalar_lea.vmem %s1, 16
        %v669 = vld [vmem:[%s668] sm:$0xf]
        %v671 = vcombine.high %v667, %v667
        %v673 = vsel %vm283, %v669, 0
        %v675 = vsel %vm287, %v667, 0
        %v677 = vsel %vm287, %v671, 0
        %679 = vmatprep.subr.mxu0 %v677
        %680 = vmatpush1.msra.mxu0 %v675
        %681 = vmatprep.subr.mxu0 0.0
        %682 = vmatpush1.msra.mxu0 0.0
        %683 = vmatprep.subr.mxu0 0.0
        %684 = vmatpush1.msra.mxu0 0.0
        %685 = vmatprep.subr.mxu0 0.0
        %686 = vmatpush1.msra.mxu0 0.0
        %687 = vmatprep.subr.mxu0 0.0
        %688 = vmatpush1.msra.mxu0 0.0
        %689 = vmatprep.subr.mxu0 0.0
        %690 = vmatpush1.msra.mxu0 0.0
        %691 = vmatprep.subr.mxu0 0.0
        %692 = vmatpush1.msra.mxu0 0.0
        %693 = vmatprep.subr.mxu0 0.0
        %694 = vmatpush1.msra.mxu0 0.0
        %695 = vmatprep.subr.mxu0 0.0
        %696 = vmatpush1.msra.mxu0 0.0
        %697 = vmatprep.subr.mxu0 0.0
        %698 = vmatpush1.msra.mxu0 0.0
        %699 = vmatprep.subr.mxu0 0.0
        %700 = vmatpush1.msra.mxu0 0.0
        %701 = vmatprep.subr.mxu0 0.0
        %702 = vmatpush1.msra.mxu0 0.0
        %703 = vmatprep.subr.mxu0 0.0
        %704 = vmatpush1.msra.mxu0 0.0
        %705 = vmatprep.subr.mxu0 0.0
        %706 = vmatpush1.msra.mxu0 0.0
        %707 = vmatprep.subr.mxu0 0.0
        %708 = vmatpush1.msra.mxu0 0.0
        %709 = vmatprep.subr.mxu0 0.0
        %710 = vmatpush1.msra.mxu0 0.0
        %711 = vmatprep.subr.mxu0 0.0
        %712 = vmatpush1.msra.mxu0 0.0
        %713 = vmatprep.subr.mxu0 0.0
        %714 = vmatpush1.msra.mxu0 0.0
        %715 = vmatprep.subr.mxu0 0.0
        %716 = vmatpush1.msra.mxu0 0.0
        %717 = vmatprep.subr.mxu0 0.0
        %718 = vmatpush1.msra.mxu0 0.0
        %719 = vmatprep.subr.mxu0 0.0
        %720 = vmatpush1.msra.mxu0 0.0
        %721 = vmatprep.subr.mxu0 0.0
        %722 = vmatpush1.msra.mxu0 0.0
        %723 = vmatprep.subr.mxu0 0.0
        %724 = vmatpush1.msra.mxu0 0.0
        %725 = vmatprep.subr.mxu0 0.0
        %726 = vmatpush1.msra.mxu0 0.0
        %727 = vmatprep.subr.mxu0 0.0
        %728 = vmatpush1.msra.mxu0 0.0
        %729 = vmatprep.subr.mxu0 0.0
        %730 = vmatpush1.msra.mxu0 0.0
        %731 = vmatprep.subr.mxu0 0.0
        %732 = vmatpush1.msra.mxu0 0.0
        %733 = vmatprep.subr.mxu0 0.0
        %734 = vmatpush1.msra.mxu0 0.0
        %735 = vmatprep.subr.mxu0 0.0
        %736 = vmatpush1.msra.mxu0 0.0
        %737 = vmatprep.subr.mxu0 0.0
        %738 = vmatpush1.msra.mxu0 0.0
        %739 = vmatprep.subr.mxu0 0.0
        %740 = vmatpush1.msra.mxu0 0.0
        %741 = vmatprep.subr.mxu0 0.0
        %742 = vmatpush1.msra.mxu0 0.0
        %743 = vmatprep.mubr.f32.mxu0 0.0
        %744 = vmatmul.mubr.f32.gmra.mrb[0].mxu0 %v673
        %v745 = vpop.f32.mrb[0].mxu0
        %v746 = vadd.f32 0.0, %v745
        %v747 = vpop.f32.mrb[0].mxu0
        %v748 = vadd.f32 0.0, %v747
        %749 = vdwg.mxu0
        %v750 = vadd.f32 %v665, %v746
        %v751 = vadd.f32 %v666, %v748
        %v752 = vld [vmem:[#allocation2 + $0x4] sm:$0xff]
        %v753 = vld [vmem:[#allocation2 + $0xc] sm:$0xf]
        %v756 = vcombine.high %v752, %v752
        %757 = vrot.lane.b32.xlu0 %v752, 126
        %v758 = vpop.permute.xlu0 %757
        %759 = vrot.lane.b32.xlu0 %v756, 126
        %v760 = vpop.permute.xlu0 %759
        %761 = vrot.lane.b32.xlu0 %v753, 126
        %v762 = vpop.permute.xlu0 %761
        %vm763 = vcmask 1031168
        %v764 = vsel %vm763, %v758, %v760
        %v765 = vsel %vm763, %v760, %v762
        %v768 = vsel %vm256, %v764, 0.0
        %v769 = vsel %vm257, %v765, 0.0
        %s770 = scalar_lea.vmem %s1, 20
        %v771 = vld [vmem:[%s770] sm:$0xf]
        %v773 = vsel %vm283, %v771, 0
        %v776 = vsel %vm287, %v768, 0
        %v779 = vsel %vm287, %v769, 0
        %781 = vmatprep.subr.mxu0 %v779
        %782 = vmatpush1.msra.mxu0 %v776
        %783 = vmatprep.subr.mxu0 0.0
        %784 = vmatpush1.msra.mxu0 0.0
        %785 = vmatprep.subr.mxu0 0.0
        %786 = vmatpush1.msra.mxu0 0.0
        %787 = vmatprep.subr.mxu0 0.0
        %788 = vmatpush1.msra.mxu0 0.0
        %789 = vmatprep.subr.mxu0 0.0
        %790 = vmatpush1.msra.mxu0 0.0
        %791 = vmatprep.subr.mxu0 0.0
        %792 = vmatpush1.msra.mxu0 0.0
        %793 = vmatprep.subr.mxu0 0.0
        %794 = vmatpush1.msra.mxu0 0.0
        %795 = vmatprep.subr.mxu0 0.0
        %796 = vmatpush1.msra.mxu0 0.0
        %797 = vmatprep.subr.mxu0 0.0
        %798 = vmatpush1.msra.mxu0 0.0
        %799 = vmatprep.subr.mxu0 0.0
        %800 = vmatpush1.msra.mxu0 0.0
        %801 = vmatprep.subr.mxu0 0.0
        %802 = vmatpush1.msra.mxu0 0.0
        %803 = vmatprep.subr.mxu0 0.0
        %804 = vmatpush1.msra.mxu0 0.0
        %805 = vmatprep.subr.mxu0 0.0
        %806 = vmatpush1.msra.mxu0 0.0
        %807 = vmatprep.subr.mxu0 0.0
        %808 = vmatpush1.msra.mxu0 0.0
        %809 = vmatprep.subr.mxu0 0.0
        %810 = vmatpush1.msra.mxu0 0.0
        %811 = vmatprep.subr.mxu0 0.0
        %812 = vmatpush1.msra.mxu0 0.0
        %813 = vmatprep.subr.mxu0 0.0
        %814 = vmatpush1.msra.mxu0 0.0
        %815 = vmatprep.subr.mxu0 0.0
        %816 = vmatpush1.msra.mxu0 0.0
        %817 = vmatprep.subr.mxu0 0.0
        %818 = vmatpush1.msra.mxu0 0.0
        %819 = vmatprep.subr.mxu0 0.0
        %820 = vmatpush1.msra.mxu0 0.0
        %821 = vmatprep.subr.mxu0 0.0
        %822 = vmatpush1.msra.mxu0 0.0
        %823 = vmatprep.subr.mxu0 0.0
        %824 = vmatpush1.msra.mxu0 0.0
        %825 = vmatprep.subr.mxu0 0.0
        %826 = vmatpush1.msra.mxu0 0.0
        %827 = vmatprep.subr.mxu0 0.0
        %828 = vmatpush1.msra.mxu0 0.0
        %829 = vmatprep.subr.mxu0 0.0
        %830 = vmatpush1.msra.mxu0 0.0
        %831 = vmatprep.subr.mxu0 0.0
        %832 = vmatpush1.msra.mxu0 0.0
        %833 = vmatprep.subr.mxu0 0.0
        %834 = vmatpush1.msra.mxu0 0.0
        %835 = vmatprep.subr.mxu0 0.0
        %836 = vmatpush1.msra.mxu0 0.0
        %837 = vmatprep.subr.mxu0 0.0
        %838 = vmatpush1.msra.mxu0 0.0
        %839 = vmatprep.subr.mxu0 0.0
        %840 = vmatpush1.msra.mxu0 0.0
        %841 = vmatprep.subr.mxu0 0.0
        %842 = vmatpush1.msra.mxu0 0.0
        %843 = vmatprep.subr.mxu0 0.0
        %844 = vmatpush1.msra.mxu0 0.0
        %845 = vmatprep.mubr.f32.mxu0 0.0
        %846 = vmatmul.mubr.f32.gmra.mrb[0].mxu0 %v773
        %v847 = vpop.f32.mrb[0].mxu0
        %v848 = vadd.f32 0.0, %v847
        %v849 = vpop.f32.mrb[0].mxu0
        %v850 = vadd.f32 0.0, %v849
        %851 = vdwg.mxu0
        %v852 = vadd.f32 %v750, %v848
        %v853 = vadd.f32 %v751, %v850
        %v854 = vld [vmem:[#allocation2 + $0x4] sm:$0xff]
        %v855 = vld [vmem:[#allocation2 + $0xc] sm:$0xf]
        %v858 = vcombine.high %v854, %v854
        %859 = vrot.lane.b32.xlu0 %v854, 98
        %v860 = vpop.permute.xlu0 %859
        %861 = vrot.lane.b32.xlu0 %v858, 98
        %v862 = vpop.permute.xlu0 %861
        %863 = vrot.lane.b32.xlu0 %v855, 98
        %v864 = vpop.permute.xlu0 %863
        %vm865 = vcmask 801792
        %v866 = vsel %vm865, %v860, %v862
        %v867 = vsel %vm865, %v862, %v864
        %v870 = vsel %vm254, %v866, 0.0
        %v871 = vsel %vm255, %v867, 0.0
        %s872 = scalar_lea.vmem %s1, 24
        %v873 = vld [vmem:[%s872] sm:$0xf]
        %v875 = vsel %vm283, %v873, 0
        %v878 = vsel %vm287, %v870, 0
        %v881 = vsel %vm287, %v871, 0
        %883 = vmatprep.subr.mxu0 %v881
        %884 = vmatpush1.msra.mxu0 %v878
        %885 = vmatprep.subr.mxu0 0.0
        %886 = vmatpush1.msra.mxu0 0.0
        %887 = vmatprep.subr.mxu0 0.0
        %888 = vmatpush1.msra.mxu0 0.0
        %889 = vmatprep.subr.mxu0 0.0
        %890 = vmatpush1.msra.mxu0 0.0
        %891 = vmatprep.subr.mxu0 0.0
        %892 = vmatpush1.msra.mxu0 0.0
        %893 = vmatprep.subr.mxu0 0.0
        %894 = vmatpush1.msra.mxu0 0.0
        %895 = vmatprep.subr.mxu0 0.0
        %896 = vmatpush1.msra.mxu0 0.0
        %897 = vmatprep.subr.mxu0 0.0
        %898 = vmatpush1.msra.mxu0 0.0
        %899 = vmatprep.subr.mxu0 0.0
        %900 = vmatpush1.msra.mxu0 0.0
        %901 = vmatprep.subr.mxu0 0.0
        %902 = vmatpush1.msra.mxu0 0.0
        %903 = vmatprep.subr.mxu0 0.0
        %904 = vmatpush1.msra.mxu0 0.0
        %905 = vmatprep.subr.mxu0 0.0
        %906 = vmatpush1.msra.mxu0 0.0
        %907 = vmatprep.subr.mxu0 0.0
        %908 = vmatpush1.msra.mxu0 0.0
        %909 = vmatprep.subr.mxu0 0.0
        %910 = vmatpush1.msra.mxu0 0.0
        %911 = vmatprep.subr.mxu0 0.0
        %912 = vmatpush1.msra.mxu0 0.0
        %913 = vmatprep.subr.mxu0 0.0
        %914 = vmatpush1.msra.mxu0 0.0
        %915 = vmatprep.subr.mxu0 0.0
        %916 = vmatpush1.msra.mxu0 0.0
        %917 = vmatprep.subr.mxu0 0.0
        %918 = vmatpush1.msra.mxu0 0.0
        %919 = vmatprep.subr.mxu0 0.0
        %920 = vmatpush1.msra.mxu0 0.0
        %921 = vmatprep.subr.mxu0 0.0
        %922 = vmatpush1.msra.mxu0 0.0
        %923 = vmatprep.subr.mxu0 0.0
        %924 = vmatpush1.msra.mxu0 0.0
        %925 = vmatprep.subr.mxu0 0.0
        %926 = vmatpush1.msra.mxu0 0.0
        %927 = vmatprep.subr.mxu0 0.0
        %928 = vmatpush1.msra.mxu0 0.0
        %929 = vmatprep.subr.mxu0 0.0
        %930 = vmatpush1.msra.mxu0 0.0
        %931 = vmatprep.subr.mxu0 0.0
        %932 = vmatpush1.msra.mxu0 0.0
        %933 = vmatprep.subr.mxu0 0.0
        %934 = vmatpush1.msra.mxu0 0.0
        %935 = vmatprep.subr.mxu0 0.0
        %936 = vmatpush1.msra.mxu0 0.0
        %937 = vmatprep.subr.mxu0 0.0
        %938 = vmatpush1.msra.mxu0 0.0
        %939 = vmatprep.subr.mxu0 0.0
        %940 = vmatpush1.msra.mxu0 0.0
        %941 = vmatprep.subr.mxu0 0.0
        %942 = vmatpush1.msra.mxu0 0.0
        %943 = vmatprep.subr.mxu0 0.0
        %944 = vmatpush1.msra.mxu0 0.0
        %945 = vmatprep.subr.mxu0 0.0
        %946 = vmatpush1.msra.mxu0 0.0
        %947 = vmatprep.mubr.f32.mxu0 0.0
        %948 = vmatmul.mubr.f32.gmra.mrb[0].mxu0 %v875
        %v949 = vpop.f32.mrb[0].mxu0
        %v950 = vadd.f32 0.0, %v949
        %v951 = vpop.f32.mrb[0].mxu0
        %v952 = vadd.f32 0.0, %v951
        %953 = vdwg.mxu0
        %v954 = vadd.f32 %v852, %v950
        %v955 = vadd.f32 %v853, %v952
        %v956 = vld [vmem:[#allocation2 + $0x4] sm:$0xff]
        %v957 = vld [vmem:[#allocation2 + $0xc] sm:$0xf]
        %s958 = scalar_lea.vmem %s1, 28
        %v959 = vld [vmem:[%s958] sm:$0xf]
        %v962 = vcombine.high %v956, %v956
        %963 = vrot.lane.b32.xlu0 %v956, 96
        %v964 = vpop.permute.xlu0 %963
        %965 = vrot.lane.b32.xlu0 %v962, 96
        %v966 = vpop.permute.xlu0 %965
        %967 = vrot.lane.b32.xlu0 %v957, 96
        %v968 = vpop.permute.xlu0 %967
        %vm969 = vcmask 785408
        %v970 = vsel %vm969, %v964, %v966
        %v971 = vsel %vm969, %v966, %v968
        %v973 = vsel %vm283, %v959, 0
        %v975 = vsel %vm287, %v970, 0
        %v977 = vsel %vm287, %v971, 0
        %979 = vmatprep.subr.mxu0 %v977
        %980 = vmatpush1.msra.mxu0 %v975
        %981 = vmatprep.subr.mxu0 0.0
        %982 = vmatpush1.msra.mxu0 0.0
        %983 = vmatprep.subr.mxu0 0.0
        %984 = vmatpush1.msra.mxu0 0.0
        %985 = vmatprep.subr.mxu0 0.0
        %986 = vmatpush1.msra.mxu0 0.0
        %987 = vmatprep.subr.mxu0 0.0
        %988 = vmatpush1.msra.mxu0 0.0
        %989 = vmatprep.subr.mxu0 0.0
        %990 = vmatpush1.msra.mxu0 0.0
        %991 = vmatprep.subr.mxu0 0.0
        %992 = vmatpush1.msra.mxu0 0.0
        %993 = vmatprep.subr.mxu0 0.0
        %994 = vmatpush1.msra.mxu0 0.0
        %995 = vmatprep.subr.mxu0 0.0
        %996 = vmatpush1.msra.mxu0 0.0
        %997 = vmatprep.subr.mxu0 0.0
        %998 = vmatpush1.msra.mxu0 0.0
        %999 = vmatprep.subr.mxu0 0.0
        %1000 = vmatpush1.msra.mxu0 0.0
        %1001 = vmatprep.subr.mxu0 0.0
        %1002 = vmatpush1.msra.mxu0 0.0
        %1003 = vmatprep.subr.mxu0 0.0
        %1004 = vmatpush1.msra.mxu0 0.0
        %1005 = vmatprep.subr.mxu0 0.0
        %1006 = vmatpush1.msra.mxu0 0.0
        %1007 = vmatprep.subr.mxu0 0.0
        %1008 = vmatpush1.msra.mxu0 0.0
        %1009 = vmatprep.subr.mxu0 0.0
        %1010 = vmatpush1.msra.mxu0 0.0
        %1011 = vmatprep.subr.mxu0 0.0
        %1012 = vmatpush1.msra.mxu0 0.0
        %1013 = vmatprep.subr.mxu0 0.0
        %1014 = vmatpush1.msra.mxu0 0.0
        %1015 = vmatprep.subr.mxu0 0.0
        %1016 = vmatpush1.msra.mxu0 0.0
        %1017 = vmatprep.subr.mxu0 0.0
        %1018 = vmatpush1.msra.mxu0 0.0
        %1019 = vmatprep.subr.mxu0 0.0
        %1020 = vmatpush1.msra.mxu0 0.0
        %1021 = vmatprep.subr.mxu0 0.0
        %1022 = vmatpush1.msra.mxu0 0.0
        %1023 = vmatprep.subr.mxu0 0.0
        %1024 = vmatpush1.msra.mxu0 0.0
        %1025 = vmatprep.subr.mxu0 0.0
        %1026 = vmatpush1.msra.mxu0 0.0
        %1027 = vmatprep.subr.mxu0 0.0
        %1028 = vmatpush1.msra.mxu0 0.0
        %1029 = vmatprep.subr.mxu0 0.0
        %1030 = vmatpush1.msra.mxu0 0.0
        %1031 = vmatprep.subr.mxu0 0.0
        %1032 = vmatpush1.msra.mxu0 0.0
        %1033 = vmatprep.subr.mxu0 0.0
        %1034 = vmatpush1.msra.mxu0 0.0
        %1035 = vmatprep.subr.mxu0 0.0
        %1036 = vmatpush1.msra.mxu0 0.0
        %1037 = vmatprep.subr.mxu0 0.0
        %1038 = vmatpush1.msra.mxu0 0.0
        %1039 = vmatprep.subr.mxu0 0.0
        %1040 = vmatpush1.msra.mxu0 0.0
        %1041 = vmatprep.subr.mxu0 0.0
        %1042 = vmatpush1.msra.mxu0 0.0
        %1043 = vmatprep.mubr.f32.mxu0 0.0
        %1044 = vmatmul.mubr.f32.gmra.mrb[0].mxu0 %v973
        %v1045 = vpop.f32.mrb[0].mxu0
        %v1046 = vadd.f32 0.0, %v1045
        %v1047 = vpop.f32.mrb[0].mxu0
        %v1048 = vadd.f32 0.0, %v1047
        %1049 = vdwg.mxu0
        %v1050 = vadd.f32 %v954, %v1046
        %v1051 = vadd.f32 %v955, %v1048
        %v1052 = vld [vmem:[#allocation2 + $0x4] sm:$0xff]
        %v1053 = vld [vmem:[#allocation2 + $0xc] sm:$0xf]
        %v1056 = vcombine.high %v1052, %v1052
        %1057 = vrot.lane.b32.xlu0 %v1052, 94
        %v1058 = vpop.permute.xlu0 %1057
        %1059 = vrot.lane.b32.xlu0 %v1056, 94
        %v1060 = vpop.permute.xlu0 %1059
        %1061 = vrot.lane.b32.xlu0 %v1053, 94
        %v1062 = vpop.permute.xlu0 %1061
        %vm1063 = vcmask 769024
        %v1064 = vsel %vm1063, %v1058, %v1060
        %v1065 = vsel %vm1063, %v1060, %v1062
        %v1068 = vsel %vm256, %v1064, 0.0
        %v1069 = vsel %vm257, %v1065, 0.0
        %s1070 = scalar_lea.vmem %s1, 32
        %v1071 = vld [vmem:[%s1070] sm:$0xf]
        %v1073 = vsel %vm283, %v1071, 0
        %v1076 = vsel %vm287, %v1068, 0
        %v1079 = vsel %vm287, %v1069, 0
        %1081 = vmatprep.subr.mxu0 %v1079
        %1082 = vmatpush1.msra.mxu0 %v1076
        %1083 = vmatprep.subr.mxu0 0.0
        %1084 = vmatpush1.msra.mxu0 0.0
        %1085 = vmatprep.subr.mxu0 0.0
        %1086 = vmatpush1.msra.mxu0 0.0
        %1087 = vmatprep.subr.mxu0 0.0
        %1088 = vmatpush1.msra.mxu0 0.0
        %1089 = vmatprep.subr.mxu0 0.0
        %1090 = vmatpush1.msra.mxu0 0.0
        %1091 = vmatprep.subr.mxu0 0.0
        %1092 = vmatpush1.msra.mxu0 0.0
        %1093 = vmatprep.subr.mxu0 0.0
        %1094 = vmatpush1.msra.mxu0 0.0
        %1095 = vmatprep.subr.mxu0 0.0
        %1096 = vmatpush1.msra.mxu0 0.0
        %1097 = vmatprep.subr.mxu0 0.0
        %1098 = vmatpush1.msra.mxu0 0.0
        %1099 = vmatprep.subr.mxu0 0.0
        %1100 = vmatpush1.msra.mxu0 0.0
        %1101 = vmatprep.subr.mxu0 0.0
        %1102 = vmatpush1.msra.mxu0 0.0
        %1103 = vmatprep.subr.mxu0 0.0
        %1104 = vmatpush1.msra.mxu0 0.0
        %1105 = vmatprep.subr.mxu0 0.0
        %1106 = vmatpush1.msra.mxu0 0.0
        %1107 = vmatprep.subr.mxu0 0.0
        %1108 = vmatpush1.msra.mxu0 0.0
        %1109 = vmatprep.subr.mxu0 0.0
        %1110 = vmatpush1.msra.mxu0 0.0
        %1111 = vmatprep.subr.mxu0 0.0
        %1112 = vmatpush1.msra.mxu0 0.0
        %1113 = vmatprep.subr.mxu0 0.0
        %1114 = vmatpush1.msra.mxu0 0.0
        %1115 = vmatprep.subr.mxu0 0.0
        %1116 = vmatpush1.msra.mxu0 0.0
        %1117 = vmatprep.subr.mxu0 0.0
        %1118 = vmatpush1.msra.mxu0 0.0
        %1119 = vmatprep.subr.mxu0 0.0
        %1120 = vmatpush1.msra.mxu0 0.0
        %1121 = vmatprep.subr.mxu0 0.0
        %1122 = vmatpush1.msra.mxu0 0.0
        %1123 = vmatprep.subr.mxu0 0.0
        %1124 = vmatpush1.msra.mxu0 0.0
        %1125 = vmatprep.subr.mxu0 0.0
        %1126 = vmatpush1.msra.mxu0 0.0
        %1127 = vmatprep.subr.mxu0 0.0
        %1128 = vmatpush1.msra.mxu0 0.0
        %1129 = vmatprep.subr.mxu0 0.0
        %1130 = vmatpush1.msra.mxu0 0.0
        %1131 = vmatprep.subr.mxu0 0.0
        %1132 = vmatpush1.msra.mxu0 0.0
        %1133 = vmatprep.subr.mxu0 0.0
        %1134 = vmatpush1.msra.mxu0 0.0
        %1135 = vmatprep.subr.mxu0 0.0
        %1136 = vmatpush1.msra.mxu0 0.0
        %1137 = vmatprep.subr.mxu0 0.0
        %1138 = vmatpush1.msra.mxu0 0.0
        %1139 = vmatprep.subr.mxu0 0.0
        %1140 = vmatpush1.msra.mxu0 0.0
        %1141 = vmatprep.subr.mxu0 0.0
        %1142 = vmatpush1.msra.mxu0 0.0
        %1143 = vmatprep.subr.mxu0 0.0
        %1144 = vmatpush1.msra.mxu0 0.0
        %1145 = vmatprep.mubr.f32.mxu0 0.0
        %1146 = vmatmul.mubr.f32.gmra.mrb[0].mxu0 %v1073
        %v1147 = vpop.f32.mrb[0].mxu0
        %v1148 = vadd.f32 0.0, %v1147
        %v1149 = vpop.f32.mrb[0].mxu0
        %v1150 = vadd.f32 0.0, %v1149
        %1151 = vdwg.mxu0
        %v1152 = vadd.f32 %v1050, %v1148
        %v1153 = vadd.f32 %v1051, %v1150
        %v1154 = vmax.f32 %v1152, 0.0
        %v1155 = vmax.f32 %v1153, 0.0
        %v1156 = vld [vmem:[%s3] sm:$0xf]
        %v1157 = vld [vmem:[%s4] sm:$0xf]
        %1159 = vset.pattern.permute.xlu0 0
        %1160 = vperm.xlu0 %1159, %v1157
        %v1161 = vpop.permute.xlu0 %1160
        %v1164 = vsel %vm283, %v1156, 0
        %v1167 = vsel %vm287, %v1154, 0
        %v1170 = vsel %vm287, %v1155, 0
        %1172 = vmatprep.subr.mxu0 %v1170
        %1173 = vmatpush1.msra.mxu0 %v1167
        %1174 = vmatprep.subr.mxu0 0.0
        %1175 = vmatpush1.msra.mxu0 0.0
        %1176 = vmatprep.subr.mxu0 0.0
        %1177 = vmatpush1.msra.mxu0 0.0
        %1178 = vmatprep.subr.mxu0 0.0
        %1179 = vmatpush1.msra.mxu0 0.0
        %1180 = vmatprep.subr.mxu0 0.0
        %1181 = vmatpush1.msra.mxu0 0.0
        %1182 = vmatprep.subr.mxu0 0.0
        %1183 = vmatpush1.msra.mxu0 0.0
        %1184 = vmatprep.subr.mxu0 0.0
        %1185 = vmatpush1.msra.mxu0 0.0
        %1186 = vmatprep.subr.mxu0 0.0
        %1187 = vmatpush1.msra.mxu0 0.0
        %1188 = vmatprep.subr.mxu0 0.0
        %1189 = vmatpush1.msra.mxu0 0.0
        %1190 = vmatprep.subr.mxu0 0.0
        %1191 = vmatpush1.msra.mxu0 0.0
        %1192 = vmatprep.subr.mxu0 0.0
        %1193 = vmatpush1.msra.mxu0 0.0
        %1194 = vmatprep.subr.mxu0 0.0
        %1195 = vmatpush1.msra.mxu0 0.0
        %1196 = vmatprep.subr.mxu0 0.0
        %1197 = vmatpush1.msra.mxu0 0.0
        %1198 = vmatprep.subr.mxu0 0.0
        %1199 = vmatpush1.msra.mxu0 0.0
        %1200 = vmatprep.subr.mxu0 0.0
        %1201 = vmatpush1.msra.mxu0 0.0
        %1202 = vmatprep.subr.mxu0 0.0
        %1203 = vmatpush1.msra.mxu0 0.0
        %1204 = vmatprep.subr.mxu0 0.0
        %1205 = vmatpush1.msra.mxu0 0.0
        %1206 = vmatprep.subr.mxu0 0.0
        %1207 = vmatpush1.msra.mxu0 0.0
        %1208 = vmatprep.subr.mxu0 0.0
        %1209 = vmatpush1.msra.mxu0 0.0
        %1210 = vmatprep.subr.mxu0 0.0
        %1211 = vmatpush1.msra.mxu0 0.0
        %1212 = vmatprep.subr.mxu0 0.0
        %1213 = vmatpush1.msra.mxu0 0.0
        %1214 = vmatprep.subr.mxu0 0.0
        %1215 = vmatpush1.msra.mxu0 0.0
        %1216 = vmatprep.subr.mxu0 0.0
        %1217 = vmatpush1.msra.mxu0 0.0
        %1218 = vmatprep.subr.mxu0 0.0
        %1219 = vmatpush1.msra.mxu0 0.0
        %1220 = vmatprep.subr.mxu0 0.0
        %1221 = vmatpush1.msra.mxu0 0.0
        %1222 = vmatprep.subr.mxu0 0.0
        %1223 = vmatpush1.msra.mxu0 0.0
        %1224 = vmatprep.subr.mxu0 0.0
        %1225 = vmatpush1.msra.mxu0 0.0
        %1226 = vmatprep.subr.mxu0 0.0
        %1227 = vmatpush1.msra.mxu0 0.0
        %1228 = vmatprep.subr.mxu0 0.0
        %1229 = vmatpush1.msra.mxu0 0.0
        %1230 = vmatprep.subr.mxu0 0.0
        %1231 = vmatpush1.msra.mxu0 0.0
        %1232 = vmatprep.subr.mxu0 0.0
        %1233 = vmatpush1.msra.mxu0 0.0
        %1234 = vmatprep.subr.mxu0 0.0
        %1235 = vmatpush1.msra.mxu0 0.0
        %1236 = vmatprep.mubr.f32.mxu0 0.0
        %1237 = vmatmul.mubr.f32.gmra.mrb[0].mxu0 %v1164
        %v1238 = vpop.f32.mrb[0].mxu0
        %v1239 = vadd.f32 %v1161, %v1238
        %v1240 = vpop.f32.mrb[0].mxu0
        %v1241 = vadd.f32 %v1161, %v1240
        %1242 = vdwg.mxu0
        %v1245 = vcombine.low %v1239, %v1241
        %v1247 = vadd.f32 %v223, %v1245
        %1248 = vst [vmem:[%s217] sm:$0xff] %v1247
        %s1249 = sand.u32 %s137, 1
        %s1250 = scalar_lea.sflag [#allocation4], %s1249
        %s1251 = sand.u32 %s137, 1
        %s1252 = smul.addr %s1251, 8
        %s1253 = scalar_lea.vmem [#allocation3], %s1252
        // Predicated region
        $region41: #{tpu_custom_call.1} parent=39 // pred_check
          %p1254 = pneg %p147
        $region42: #{tpu_custom_call.1} parent=39 // pred_check_branch
          %1256 = sbr.rel (%p1254) target = $region44
        $region43: #{tpu_custom_call.1} parent=39 // pred_region
          %s1258 = ssub.s32 128, 128
          %1259 = vsyncadd %s1250, %s1258
          %s1260 = smul.addr %s19, 2
          %s1261 = smul.addr %s1260, 64
          %s1262 = scalar_lea.hbm %s5, %s1261
          %s1264 = sshll.u32 %s1253, 4
          %s1265 = int_to_ptr.vmem [resolvable:$true] %s1264
          %1267 = dma.vmem_to_hbm [thread:$0]  %s1265, 128, %s1262, %s1250
        $region44: #{tpu_custom_call.1} parent=39 // pred_fallthru
          _
      $region40: #{tpu_custom_call.1} parent=5 // pred_fallthru
        _
      %p1268 = scmp.le.s32.totalorder 2, %s14
      // Predicated region
      $region45: #{tpu_custom_call.1} parent=5 // pred_check
        %p1269 = pneg %p1268
      $region46: #{tpu_custom_call.1} parent=5 // pred_check_branch
        %1271 = sbr.rel (%p1269) target = $region48
      $region47: #{tpu_custom_call.1} parent=5 // pred_region
        %s1272 = ssub.s32 %s14, 2
        // Predicated region
        $region49: #{tpu_custom_call.1} parent=47 // pred_check
          %p1273 = pneg %p153
        $region50: #{tpu_custom_call.1} parent=47 // pred_check_branch
          %1275 = sbr.rel (%p1273) target = $region52
        $region51: #{tpu_custom_call.1} parent=47 // pred_region
          %s1276 = sand.u32 %s138, 1
          %s1277 = scalar_lea.sflag [#allocation4], %s1276
          %s1278 = sand.u32 %s138, 1
          %s1279 = smul.addr %s1278, 8
          %s1280 = scalar_lea.vmem [#allocation3], %s1279
          %1281 = dma.done %s1277, 128
        $region52: #{tpu_custom_call.1} parent=47 // pred_fallthru
          _
      $region48: #{tpu_custom_call.1} parent=5 // pred_fallthru
        _
    $region6: #{tpu_custom_call.1} parent=1 // loop_footer
      %s18 = sadd.s32 1, %s14
    $region7: #{tpu_custom_call.1} parent=1 // loop_footer_branch
      %13 = sbr.rel target = $region3
    $region8: #{tpu_custom_call.1} parent=1 // loop_exit
      _
    %1282 = vsyncpa [#allocation4], 1
    %s1283 = scalar_lea.sflag [#allocation4], 1
    %1284 = vsyncpa %s1283, 1

</llo_original>
